<compile_context>
chip_gen: v7x
topology: tpu7x:2x2x1
jax: 0.10.0
libtpu: 0.0.40
codegen_flags: <defaults>
</compile_context>

<pallas_src>
import math

import jax
import jax.numpy as jnp
from jax.experimental import pallas as pl
from jax.experimental.pallas import tpu as pltpu


def _identity_kernel(x_ref, o_ref):
    # DummyLayerNorm.forward(x) == x
    o_ref[...] = x_ref[...]


# Inputs at or below this size are a single DMA either way; skip tiling.
_SMALL_BYTES = 1 << 20  # 1 MiB

# Conservative VMEM budget for the tiled path:
#   2 (double-buffer) x (input tile + output tile) must fit comfortably under
#   the 32 MiB scoped-VMEM default, which also covers v7x's 64 MiB physical VMEM.
_VMEM_BUDGET_BYTES = 16 << 20


def dummy_layer_norm(x, eps: float = 1e-05):
    """Identity forward of DummyLayerNorm via a Pallas TPU kernel.

    `eps` is accepted for signature parity but unused (as in the module).
    """
    del eps  # unused, exactly like the PyTorch module
    orig_shape = x.shape
    hidden = int(orig_shape[-1])
    rows = int(math.prod(orig_shape[:-1]))
    x2d = x.reshape(rows, hidden)
    nbytes = rows * hidden * x.dtype.itemsize

    if nbytes <= _SMALL_BYTES or rows < 8:
        # Tiny input: one block equal to the full array (legal even when
        # rows % 8 != 0 because the block equals the full dims), no grid, and
        # the output aliases the input buffer.
        out2d = pl.pallas_call(
            _identity_kernel,
            out_shape=jax.ShapeDtypeStruct((rows, hidden), x.dtype),
            in_specs=[pl.BlockSpec(memory_space=pltpu.MemorySpace.VMEM)],
            out_specs=pl.BlockSpec(memory_space=pltpu.MemorySpace.VMEM),
            input_output_aliases={0: 0},
        )(x2d)
        return out2d.reshape(orig_shape)

    # Large input: row-tiled copy.  Tile rows are a multiple of 8 (unmasked
    # stores), large (<=1024) to sit on the HBM-roofline plateau, and capped so
    # 2x double-buffered input + output tiles stay under the VMEM budget.
    bytes_per_row = hidden * x.dtype.itemsize
    tm_cap = max(8, (_VMEM_BUDGET_BYTES // (4 * bytes_per_row)) // 8 * 8)
    tm = min(1024, tm_cap, (rows // 8) * 8)

    out2d = pl.pallas_call(
        _identity_kernel,
        out_shape=jax.ShapeDtypeStruct((rows, hidden), x.dtype),
        grid=(pl.cdiv(rows, tm),),
        in_specs=[pl.BlockSpec((tm, hidden), lambda i: (i, 0))],
        out_specs=pl.BlockSpec((tm, hidden), lambda i: (i, 0)),
        input_output_aliases={0: 0},
        compiler_params=pltpu.CompilerParams(
            dimension_semantics=("parallel",),
        ),
    )(x2d)
    return out2d.reshape(orig_shape)


if __name__ == "__main__":
    key = jax.random.PRNGKey(0)
    k1, k2 = jax.random.split(key)

    # Shape consistent with the module's usage: torch.rand(2, 3, 768).
    x_small = jax.random.uniform(k1, (2, 3, 768), dtype=jnp.float32)
    y_small = dummy_layer_norm(x_small)
    jax.block_until_ready(y_small)
    assert y_small.shape == x_small.shape
    assert y_small.dtype == x_small.dtype
    assert bool(jnp.all(y_small == x_small))

    # Exercise the tiled (pipelined, parallel-grid) path as well.
    x_big = jax.random.uniform(k2, (8, 256, 768), dtype=jnp.float32)  # ~6 MiB
    y_big = dummy_layer_norm(x_big)
    jax.block_until_ready(y_big)
    assert y_big.shape == x_big.shape
    assert bool(jnp.all(y_big == x_big))

    print("KERNEL_OK")
</pallas_src>

<mosaic_0001>
module attributes {stable_mosaic.version = 11 : i64} {
  func.func @_identity_kernel(%arg0: memref<6x768xf32, #tpu.memory_space<vmem>>, %arg1: memref<6x768xf32, #tpu.memory_space<vmem>>) attributes {dimension_semantics = [], scalar_prefetch = 0 : i64, scratch_operands = 0 : i64, tpu.core_type = #tpu.core_type<tc>} {
    %c0 = arith.constant 0 : index
    %c0_0 = arith.constant 0 : index
    %0 = vector.load %arg0[%c0, %c0_0] : memref<6x768xf32, #tpu.memory_space<vmem>>, vector<6x768xf32>
    %c0_1 = arith.constant 0 : index
    %c0_2 = arith.constant 0 : index
    %1 = vector.load %arg1[%c0_1, %c0_2] : memref<6x768xf32, #tpu.memory_space<vmem>>, vector<6x768xf32>
    tpu.vector_store %arg1[%c0_1, %c0_2], %0 {strides = array<i32>} : memref<6x768xf32, #tpu.memory_space<vmem>>, vector<6x768xf32>,
    return
  }
}

</mosaic_0001>

<llo_original>
// kernel: tpu_custom_call.1
$region0: #{tpu_custom_call.1}
  #allocation0 [shape = 'u32[]', space=smem, size = 0x4, offset = 0x4, fixed_abs, tag = 'smem constant byte address 0x4 - core index']
  #allocation1 [shape = 'u32[144,128]{1,0:T(1,128)}', space=vmem, size = 0x12000, scoped, tag = 'internal scratch']
  %s0 = inlined_call_operand.hbm [shape: f32[6,768], index: 0, kind: input, shape index: {}, may-alias: {0,1}]
  %s1 = inlined_call_operand.hbm [shape: f32[6,768], index: 1, kind: output, shape index: {}, may-alias: {0,1}]
  %s2 = sld [smem:[#allocation0]]
  $region18: #{tpu_custom_call.1} parent=0
    _
  %s4 = ssub.s32 1, %s2
  %s5 = scalar_select 0, %s4, %s2
  $region1: #{tpu_custom_call.1} parent=0
    #allocation2 [shape = 'u8[24576]{0}', space=vmem, size = 0x6000, scoped, tag = 'input window, operand 0, single buffered']
    #allocation3 [shape = 's32[1]{0}', space=sflag, size = 0x4, scoped, tag = 'scoped memory for tpu_custom_call.1']
    #allocation4 [shape = 's32[1]{0}', space=sflag, size = 0x4, scoped, tag = 'scoped memory for tpu_custom_call.1']
    #allocation5 [shape = 'u8[24576]{0}', space=vmem, size = 0x6000, scoped, tag = 'output window, operand 0, single buffered']
    %6 = vsyncpa [#allocation3], 0
    %7 = vsyncpa [#allocation4], 0
    // Predicated region
    $region2: #{tpu_custom_call.1} parent=1 // pred_check
      _
    $region3: #{tpu_custom_call.1} parent=1 // pred_check_branch
      %9 = sbr.rel (0) target = $region5
    $region4: #{tpu_custom_call.1} parent=1 // pred_region
      %s11 = ssub.s32 768, 768
      %12 = vsyncadd [#allocation3], %s11
      %s14 = sshll.u32 [#allocation2], 4
      %s15 = int_to_ptr.vmem [resolvable:$true] %s14
      %17 = dma.hbm_to_vmem [thread:$0]  %s0, 768, %s15, [#allocation3]
    $region5: #{tpu_custom_call.1} parent=1 // pred_fallthru
      _
    // Predicated region
    $region6: #{tpu_custom_call.1} parent=1 // pred_check
      _
    $region7: #{tpu_custom_call.1} parent=1 // pred_check_branch
      %19 = sbr.rel (0) target = $region9
    $region8: #{tpu_custom_call.1} parent=1 // pred_region
      %20 = dma.done [#allocation3], 768
    $region9: #{tpu_custom_call.1} parent=1 // pred_fallthru
      _
    %v21 = vld [vmem:[#allocation2] sm:$0x3f]
    %v22 = vld [vmem:[#allocation2 + $0x8] sm:$0x3f]
    %v23 = vld [vmem:[#allocation2 + $0x10] sm:$0x3f]
    %v24 = vld [vmem:[#allocation2 + $0x18] sm:$0x3f]
    %v25 = vld [vmem:[#allocation2 + $0x20] sm:$0x3f]
    %v26 = vld [vmem:[#allocation2 + $0x28] sm:$0x3f]
    %27 = vst [vmem:[#allocation5] sm:$0x3f] %v21
    %28 = vst [vmem:[#allocation5 + $0x8] sm:$0x3f] %v22
    %29 = vst [vmem:[#allocation5 + $0x10] sm:$0x3f] %v23
    %30 = vst [vmem:[#allocation5 + $0x18] sm:$0x3f] %v24
    %31 = vst [vmem:[#allocation5 + $0x20] sm:$0x3f] %v25
    %32 = vst [vmem:[#allocation5 + $0x28] sm:$0x3f] %v26
    // Predicated region
    $region10: #{tpu_custom_call.1} parent=1 // pred_check
      _
    $region11: #{tpu_custom_call.1} parent=1 // pred_check_branch
      %34 = sbr.rel (0) target = $region13
    $region12: #{tpu_custom_call.1} parent=1 // pred_region
      %s36 = ssub.s32 768, 768
      %37 = vsyncadd [#allocation4], %s36
      %s39 = sshll.u32 [#allocation5], 4
      %s40 = int_to_ptr.vmem [resolvable:$true] %s39
      %42 = dma.vmem_to_hbm [thread:$0]  %s40, 768, %s1, [#allocation4]
    $region13: #{tpu_custom_call.1} parent=1 // pred_fallthru
      _
    // Predicated region
    $region14: #{tpu_custom_call.1} parent=1 // pred_check
      _
    $region15: #{tpu_custom_call.1} parent=1 // pred_check_branch
      %44 = sbr.rel (0) target = $region17
    $region16: #{tpu_custom_call.1} parent=1 // pred_region
      %45 = dma.done [#allocation4], 768
    $region17: #{tpu_custom_call.1} parent=1 // pred_fallthru
      _
    %46 = vsyncpa [#allocation3], 1
    %47 = vsyncpa [#allocation4], 1

</llo_original>
